<compile_context>
chip_gen: v6e
topology: v6e:2x2x1
jax: 0.10.0
libtpu: 0.0.40
codegen_flags: <defaults>
</compile_context>

<pallas_src>
import jax
import jax.numpy as jnp
from jax.experimental import pallas as pl
from jax.experimental.pallas import tpu as pltpu

_LANES = 128
# <=2 MiB per block -> 4 resident buffers (2x-buffered in + out) stay <=8 MiB,
# comfortably inside v5e's 16 MiB scoped default and v7x's 64 MiB physical VMEM.
_MAX_BLOCK_BYTES = 2 * 1024 * 1024


def _identity_kernel(x_ref, o_ref):
    # Straight VMEM tile copy (output aliases input in HBM).
    o_ref[...] = x_ref[...]


def _choose_block_rows(rows: int, itemsize: int) -> int:
    """Largest row-block that divides `rows`, is a multiple of 8, and fits the budget."""
    max_rows = max(8, _MAX_BLOCK_BYTES // (_LANES * itemsize))
    if rows <= max_rows:
        return rows  # single block == full array dims (always a legal block shape)
    for cand in range(max_rows - (max_rows % 8), 7, -8):
        if rows % cand == 0:
            return cand
    return rows  # ragged fallback: one big block (full-dim rule keeps it legal)


@jax.jit
def dummy_module_forward(x: jax.Array) -> jax.Array:
    """Pallas TPU implementation of DummyModule.forward (identity)."""
    orig_shape = x.shape
    total = x.size
    itemsize = jnp.dtype(x.dtype).itemsize

    if total % _LANES == 0:
        rows, cols = total // _LANES, _LANES
        block_rows = _choose_block_rows(rows, itemsize)
    else:
        # Ragged total: keep everything in one lane-major row.
        rows, cols = 1, total
        block_rows = 1

    x2 = x.reshape(rows, cols)
    grid = (rows // block_rows,)

    y2 = pl.pallas_call(
        _identity_kernel,
        out_shape=jax.ShapeDtypeStruct((rows, cols), x.dtype),
        grid=grid,
        in_specs=[pl.BlockSpec((block_rows, cols), lambda i: (i, 0))],
        out_specs=pl.BlockSpec((block_rows, cols), lambda i: (i, 0)),
        input_output_aliases={0: 0},
        compiler_params=pltpu.CompilerParams(
            dimension_semantics=("parallel",),
        ),
    )(x2)
    return y2.reshape(orig_shape)


if __name__ == "__main__":
    key = jax.random.PRNGKey(0)
    # Small NCHW input consistent with a CIFAR-style feature map.
    x = jax.random.normal(key, (2, 4, 16, 16), dtype=jnp.float32)

    y = dummy_module_forward(x)
    jax.block_until_ready(y)

    assert y.shape == x.shape and y.dtype == x.dtype
    assert bool(jnp.array_equal(y, x))
    print("KERNEL_OK")
</pallas_src>

<mosaic_0001>
module attributes {stable_mosaic.version = 11 : i64} {
  func.func @_identity_kernel(%arg0: i32, %arg1: memref<16x128xf32, #tpu.memory_space<vmem>>, %arg2: memref<16x128xf32, #tpu.memory_space<vmem>>) attributes {dimension_semantics = [#tpu.dimension_semantics<parallel>], iteration_bounds = array<i64: 1>, scalar_prefetch = 0 : i64, scratch_operands = 0 : i64, tpu.core_type = #tpu.core_type<tc>, window_params = [{transform_indices = @transform_0, window_bounds = array<i64: 16, 128>}, {transform_indices = @transform_1, window_bounds = array<i64: 16, 128>}]} {
    %c0 = arith.constant 0 : index
    %c0_0 = arith.constant 0 : index
    %0 = vector.load %arg1[%c0, %c0_0] : memref<16x128xf32, #tpu.memory_space<vmem>>, vector<16x128xf32>
    %c0_1 = arith.constant 0 : index
    %c0_2 = arith.constant 0 : index
    %1 = vector.load %arg2[%c0_1, %c0_2] : memref<16x128xf32, #tpu.memory_space<vmem>>, vector<16x128xf32>
    tpu.vector_store %arg2[%c0_1, %c0_2], %0 {strides = array<i32>} : memref<16x128xf32, #tpu.memory_space<vmem>>, vector<16x128xf32>,
    return
  }
  func.func @transform_0(%arg0: i32) -> (i32, i32) {
    %c0_i32 = arith.constant 0 : i32
    %c0_i32_0 = arith.constant 0 : i32
    return %arg0, %c0_i32 : i32, i32
  }
  func.func @transform_1(%arg0: i32) -> (i32, i32) {
    %c0_i32 = arith.constant 0 : i32
    %c0_i32_0 = arith.constant 0 : i32
    return %arg0, %c0_i32 : i32, i32
  }
}

</mosaic_0001>

<llo_original>
// kernel: dummy_module_forward.1
$region0: #{dummy_module_forward.1}
  #allocation0 [shape = 'u32[]', space=smem, size = 0x4, offset = 0x4, fixed_abs, tag = 'smem constant byte address 0x4 - core index']
  #allocation1 [shape = 'u32[144,128]{1,0:T(1,128)}', space=vmem, size = 0x12000, scoped, tag = 'internal scratch']
  %s0 = inlined_call_operand.vmem [shape: f32[16,128], index: 0, kind: input, shape index: {}, may-alias: {0,1}]
  %s1 = inlined_call_operand.vmem [shape: f32[16,128], index: 1, kind: output, shape index: {}, may-alias: {0,1}]
  %s2 = sld [smem:[#allocation0]]
  $region14: #{dummy_module_forward.1} parent=0
    _
  %s4 = ssub.s32 1, %s2
  %s5 = scalar_select 0, %s4, %s2
  // Predicated region
  $region2: #{dummy_module_forward.1} parent=0 // pred_check
    _
  $region3: #{dummy_module_forward.1} parent=0 // pred_check_branch
    %7 = sbr.rel (0) target = $region5
  $region4: #{dummy_module_forward.1} parent=0 // pred_region
    _
  $region5: #{dummy_module_forward.1} parent=0 // pred_fallthru
    _
  %v8 = vld [vmem:[%s0] sm:$0xff]
  %v9 = vld [vmem:[%s0 + $0x8] sm:$0xff]
  %10 = vst [vmem:[%s1] sm:$0xff] %v8
  %11 = vst [vmem:[%s1 + $0x8] sm:$0xff] %v9
  // Predicated region
  $region6: #{dummy_module_forward.1} parent=0 // pred_check
    _
  $region7: #{dummy_module_forward.1} parent=0 // pred_check_branch
    %13 = sbr.rel (0) target = $region9
  $region8: #{dummy_module_forward.1} parent=0 // pred_region
    _
  $region9: #{dummy_module_forward.1} parent=0 // pred_fallthru
    _
  // Predicated region
  $region10: #{dummy_module_forward.1} parent=0 // pred_check
    _
  $region11: #{dummy_module_forward.1} parent=0 // pred_check_branch
    %15 = sbr.rel (0) target = $region13
  $region12: #{dummy_module_forward.1} parent=0 // pred_region
    _
  $region13: #{dummy_module_forward.1} parent=0 // pred_fallthru
    _

</llo_original>
